<compile_context>
chip_gen: v5e
topology: v5e:2x2
jax: 0.10.0
libtpu: 0.0.40
codegen_flags: <defaults>
</compile_context>

<pallas_src>
import jax
import jax.numpy as jnp
from jax import lax
from jax.experimental import pallas as pl
from jax.experimental.pallas import tpu as pltpu


def _round_up(x: int, m: int) -> int:
    return ((x + m - 1) // m) * m


# ----------------------------------------------------------------------------
# Kernel: patch projection  out = x @ w + b   (bias fused, f32 accumulation)
# ----------------------------------------------------------------------------
def _patch_proj_kernel(x_ref, w_ref, b_ref, o_ref):
    acc = jnp.dot(x_ref[...], w_ref[...], preferred_element_type=jnp.float32)
    o_ref[...] = (acc + b_ref[...]).astype(o_ref.dtype)


def pallas_patch_proj(x2d, w, b, *, tm_max=2048):
    """x2d: (M, K); w: (K, N); b: (N,).  Returns (M, Nout) with
    Nout = N if N >= 128 else 128 (padded channels are zero; caller strips
    them downstream where a copy already happens)."""
    M, K = x2d.shape
    K2, N = w.shape
    assert K2 == K and b.shape == (N,)

    # Lane handling for the output: emit native width when >= 128 (tail lanes,
    # if any, are cheap masked stores); pad only the tiny weight/bias when the
    # channel dim is below one full lane group.
    if N >= 128:
        Nout = N
        wp, bp = w, b
    else:
        Nout = 128
        wp = jnp.pad(w, ((0, 0), (0, Nout - N)))
        bp = jnp.pad(b, (0, Nout - N))
    bp = bp.astype(jnp.float32).reshape(1, Nout)

    # Row tile: large, multiple of 8, no activation padding (Pallas handles the
    # ragged last block by masking OOB writes; rows are independent).
    tm = min(tm_max, _round_up(M, 8))

    itemsize = x2d.dtype.itemsize

    def _footprint(t):
        # double-buffered x & out blocks + (conservatively 2x) weight & bias
        return (2 * t * K + 2 * t * Nout + 2 * (K * Nout + Nout)) * itemsize

    # Keep the footprint comfortably under the smallest scoped-VMEM budget we
    # care about (v5e 16 MiB default / v7x 64 MiB physical), then request it.
    VMEM_BUDGET = 24 * 1024 * 1024
    while tm > 64 and _footprint(tm) > VMEM_BUDGET:
        tm = _round_up(max(tm // 2, 8), 8)
    vmem_limit = int(min(max(_footprint(tm) + (8 << 20), 16 << 20), 48 << 20))

    grid = (pl.cdiv(M, tm),)

    out = pl.pallas_call(
        _patch_proj_kernel,
        out_shape=jax.ShapeDtypeStruct((M, Nout), x2d.dtype),
        grid_spec=pltpu.PrefetchScalarGridSpec(
            num_scalar_prefetch=0,
            grid=grid,
            in_specs=[
                pl.BlockSpec((tm, K), lambda i: (i, 0)),      # K = full dim
                pl.BlockSpec((K, Nout), lambda i: (0, 0)),    # resident weight
                pl.BlockSpec((1, Nout), lambda i: (0, 0)),    # resident bias
            ],
            out_specs=pl.BlockSpec((tm, Nout), lambda i: (i, 0)),
        ),
        compiler_params=pltpu.CompilerParams(
            dimension_semantics=("parallel",),
            vmem_limit_bytes=vmem_limit,
        ),
    )(x2d, wp, bp)
    return out


# ----------------------------------------------------------------------------
# PatchEmbedding forward
# ----------------------------------------------------------------------------
def _center_pad(size, patch):
    pad = (patch - size % patch) % patch
    return pad // 2, pad - pad // 2


def patch_embedding_forward(input_plevel, input_surface, params, patch_size):
    """input_plevel: (B, C_pl, Z, H, W); input_surface: (B, C_sfc, H, W).
    params: w_plevel (c_dim, C_pl, pz, ph, pw), b_plevel (c_dim,),
            w_surface (c_dim, C_sfc, ph, pw), b_surface (c_dim,).
    Returns (x, embedding_shape) like the torch module."""
    pz, ph, pw = patch_size
    B, Cp, Z, H, W = input_plevel.shape
    Bs, Cs, Hs, Ws = input_surface.shape
    assert B == Bs and (H, W) == (Hs, Ws)

    # --- CustomPad3d / CustomPad2d: center constant padding (index plumbing) ---
    zf, zb = _center_pad(Z, pz)
    hf, hb = _center_pad(H, ph)
    wf, wb = _center_pad(W, pw)
    plevel = jnp.pad(input_plevel, ((0, 0), (0, 0), (zf, zb), (hf, hb), (wf, wb)))
    surface = jnp.pad(input_surface, ((0, 0), (0, 0), (hf, hb), (wf, wb)))

    Zp, Hp, Wp = Z + zf + zb, H + hf + hb, W + wf + wb
    Zt, Ht, Wt = Zp // pz, Hp // ph, Wp // pw
    c_dim = params["w_plevel"].shape[0]

    # --- conv_plevel (stride == kernel) as patchify + Pallas matmul ---
    xp = plevel.reshape(B, Cp, Zt, pz, Ht, ph, Wt, pw)
    xp = jnp.transpose(xp, (0, 2, 4, 6, 1, 3, 5, 7))  # (B,Zt,Ht,Wt,Cp,pz,ph,pw)
    xp = xp.reshape(B * Zt * Ht * Wt, Cp * pz * ph * pw)
    # Note: weight reshape/pad is tiny; hoist to param setup if called per-step.
    w_pl = params["w_plevel"].reshape(c_dim, Cp * pz * ph * pw).T
    tok_plevel = pallas_patch_proj(xp, w_pl, params["b_plevel"])
    Nout = tok_plevel.shape[-1]
    tok_plevel = tok_plevel.reshape(B, Zt, Ht, Wt, Nout)

    # --- conv_surface (stride == kernel) as patchify + Pallas matmul ---
    xs = surface.reshape(B, Cs, Ht, ph, Wt, pw)
    xs = jnp.transpose(xs, (0, 2, 4, 1, 3, 5))         # (B,Ht,Wt,Cs,ph,pw)
    xs = xs.reshape(B * Ht * Wt, Cs * ph * pw)
    w_sf = params["w_surface"].reshape(c_dim, Cs * ph * pw).T
    tok_surface = pallas_patch_proj(xs, w_sf, params["b_surface"])
    tok_surface = tok_surface.reshape(B, 1, Ht, Wt, Nout)

    # --- cat along level dim (plevel first, surface last) + flatten tokens ---
    x = jnp.concatenate([tok_plevel, tok_surface], axis=1)  # (B, Zt+1, Ht, Wt, Nout)
    if Nout != c_dim:
        # Strip lane padding here: the concat already copies, the slice fuses.
        x = x[..., :c_dim]
    embedding_shape = x.shape
    x = x.reshape(B, -1, c_dim)
    return x, embedding_shape


# ----------------------------------------------------------------------------
# Pure-JAX reference (real convolutions) for a sanity check.
# ----------------------------------------------------------------------------
def patch_embedding_reference(input_plevel, input_surface, params, patch_size):
    pz, ph, pw = patch_size
    B, Cp, Z, H, W = input_plevel.shape
    zf, zb = _center_pad(Z, pz)
    hf, hb = _center_pad(H, ph)
    wf, wb = _center_pad(W, pw)
    plevel = jnp.pad(input_plevel, ((0, 0), (0, 0), (zf, zb), (hf, hb), (wf, wb)))
    surface = jnp.pad(input_surface, ((0, 0), (0, 0), (hf, hb), (wf, wb)))

    pl_tok = lax.conv_general_dilated(
        plevel, params["w_plevel"], window_strides=(pz, ph, pw), padding="VALID",
        dimension_numbers=("NCDHW", "OIDHW", "NCDHW"),
        precision=lax.Precision.HIGHEST,
    ) + params["b_plevel"].reshape(1, -1, 1, 1, 1)
    sf_tok = lax.conv_general_dilated(
        surface, params["w_surface"], window_strides=(ph, pw), padding="VALID",
        dimension_numbers=("NCHW", "OIHW", "NCHW"),
        precision=lax.Precision.HIGHEST,
    ) + params["b_surface"].reshape(1, -1, 1, 1)

    x = jnp.concatenate([pl_tok, sf_tok[:, :, None]], axis=2)  # (B,C,Zt+1,Ht,Wt)
    x = jnp.transpose(x, (0, 2, 3, 4, 1))
    embedding_shape = x.shape
    return x.reshape(x.shape[0], -1, x.shape[-1]), embedding_shape


if __name__ == "__main__":
    # Small shapes consistent with the module (patch_size = (2, 4, 4)):
    #   plevel  (B, C_pl, Z, H, W) = (2, 3, 5, 14, 18)  -> padded to (6, 16, 20)
    #   surface (B, C_sfc, H, W)   = (2, 4, 14, 18)
    #   c_dim = 32; tokens per batch = (Zt + 1) * Ht * Wt = 4*4*5 = 80
    B, c_dim = 2, 32
    patch_size = (2, 4, 4)
    C_pl, Z, H, W = 3, 5, 14, 18
    C_sfc = 4

    key = jax.random.PRNGKey(0)
    kpl, ksf, kw1, kb1, kw2, kb2 = jax.random.split(key, 6)
    input_plevel = jax.random.normal(kpl, (B, C_pl, Z, H, W), jnp.float32)
    input_surface = jax.random.normal(ksf, (B, C_sfc, H, W), jnp.float32)

    params = {
        "w_plevel": 0.05 * jax.random.normal(kw1, (c_dim, C_pl) + patch_size, jnp.float32),
        "b_plevel": 0.1 * jax.random.normal(kb1, (c_dim,), jnp.float32),
        "w_surface": 0.05 * jax.random.normal(kw2, (c_dim, C_sfc) + patch_size[1:], jnp.float32),
        "b_surface": 0.1 * jax.random.normal(kb2, (c_dim,), jnp.float32),
    }

    x, emb_shape = patch_embedding_forward(input_plevel, input_surface, params, patch_size)
    x = jax.block_until_ready(x)

    x_ref, emb_shape_ref = patch_embedding_reference(input_plevel, input_surface, params, patch_size)

    Zt = (Z + (patch_size[0] - Z % patch_size[0]) % patch_size[0]) // patch_size[0]
    Ht = (H + (patch_size[1] - H % patch_size[1]) % patch_size[1]) // patch_size[1]
    Wt = (W + (patch_size[2] - W % patch_size[2]) % patch_size[2]) // patch_size[2]
    assert tuple(emb_shape) == (B, Zt + 1, Ht, Wt, c_dim), emb_shape
    assert tuple(emb_shape) == tuple(emb_shape_ref), (emb_shape, emb_shape_ref)
    assert x.shape == (B, (Zt + 1) * Ht * Wt, c_dim), x.shape
    assert jnp.allclose(x, x_ref, atol=1e-3, rtol=1e-3), "mismatch vs reference"
    print("KERNEL_OK")
</pallas_src>

<mosaic_0001>
module attributes {stable_mosaic.version = 11 : i64} {
  func.func @_patch_proj_kernel(%arg0: i32, %arg1: memref<120x96xf32, #tpu.memory_space<vmem>>, %arg2: memref<96x128xf32, #tpu.memory_space<vmem>>, %arg3: memref<1x128xf32, #tpu.memory_space<vmem>>, %arg4: memref<120x128xf32, #tpu.memory_space<vmem>>) attributes {dimension_semantics = [#tpu.dimension_semantics<parallel>], iteration_bounds = array<i64: 1>, scalar_prefetch = 0 : i64, scratch_operands = 0 : i64, tpu.core_type = #tpu.core_type<tc>, window_params = [{transform_indices = @transform_0, window_bounds = array<i64: 120, 96>}, {pipeline_mode = #tpu.pipeline_mode<synchronous>, transform_indices = @transform_1, window_bounds = array<i64: 96, 128>}, {pipeline_mode = #tpu.pipeline_mode<synchronous>, transform_indices = @transform_2, window_bounds = array<i64: 1, 128>}, {transform_indices = @transform_3, window_bounds = array<i64: 120, 128>}]} {
    %c0 = arith.constant 0 : index
    %c0_0 = arith.constant 0 : index
    %0 = vector.load %arg1[%c0, %c0_0] : memref<120x96xf32, #tpu.memory_space<vmem>>, vector<120x96xf32>
    %c0_1 = arith.constant 0 : index
    %c0_2 = arith.constant 0 : index
    %1 = vector.load %arg2[%c0_1, %c0_2] : memref<96x128xf32, #tpu.memory_space<vmem>>, vector<96x128xf32>
    %cst = arith.constant dense<0.000000e+00> : vector<120x128xf32>
    %2 = tpu.matmul %0, %1, %cst {dimension_numbers = #tpu.dot_dimension_numbers<[1], [0], [0], [1], [0, 0, 1, 1], [], []>} : vector<120x96xf32>, vector<96x128xf32>, vector<120x128xf32> -> vector<120x128xf32>
    %c0_3 = arith.constant 0 : index
    %c0_4 = arith.constant 0 : index
    %3 = vector.load %arg3[%c0_3, %c0_4] : memref<1x128xf32, #tpu.memory_space<vmem>>, vector<1x128xf32>
    %4 = vector.broadcast %3 : vector<1x128xf32> to vector<120x128xf32>
    %5 = arith.addf %2, %4 : vector<120x128xf32>
    %c0_5 = arith.constant 0 : index
    %c0_6 = arith.constant 0 : index
    %6 = vector.load %arg4[%c0_5, %c0_6] : memref<120x128xf32, #tpu.memory_space<vmem>>, vector<120x128xf32>
    tpu.vector_store %arg4[%c0_5, %c0_6], %5 {strides = array<i32>} : memref<120x128xf32, #tpu.memory_space<vmem>>, vector<120x128xf32>,
    return
  }
  func.func @transform_0(%arg0: i32) -> (i32, i32) {
    %c0_i32 = arith.constant 0 : i32
    %c0_i32_0 = arith.constant 0 : i32
    return %arg0, %c0_i32 : i32, i32
  }
  func.func @transform_1(%arg0: i32) -> (i32, i32) {
    %c0_i32 = arith.constant 0 : i32
    %c0_i32_0 = arith.constant 0 : i32
    %c0_i32_1 = arith.constant 0 : i32
    return %c0_i32, %c0_i32_0 : i32, i32
  }
  func.func @transform_2(%arg0: i32) -> (i32, i32) {
    %c0_i32 = arith.constant 0 : i32
    %c0_i32_0 = arith.constant 0 : i32
    %c0_i32_1 = arith.constant 0 : i32
    return %c0_i32, %c0_i32_0 : i32, i32
  }
  func.func @transform_3(%arg0: i32) -> (i32, i32) {
    %c0_i32 = arith.constant 0 : i32
    %c0_i32_0 = arith.constant 0 : i32
    return %arg0, %c0_i32 : i32, i32
  }
}

</mosaic_0001>

<llo_original>
// kernel: tpu_custom_call.1
$region0: #{tpu_custom_call.1}
  #allocation0 [shape = 'u32[]', space=smem, size = 0x4, offset = 0x4, fixed_abs, tag = 'smem constant byte address 0x4 - core index']
  #allocation1 [shape = 'u32[72,128]{1,0:T(1,128)}', space=vmem, size = 0x9000, scoped, tag = 'internal scratch']
  %s0 = inlined_call_operand.vmem [shape: f32[120,96], index: 0, kind: input, shape index: {}]
  %s1 = inlined_call_operand.vmem [shape: f32[96,128], index: 1, kind: input, shape index: {}]
  %s2 = inlined_call_operand.vmem [shape: f32[1,128], index: 2, kind: input, shape index: {}]
  %s3 = inlined_call_operand.hbm [shape: f32[120,128], index: 3, kind: output, shape index: {}]
  %s4 = sld [smem:[#allocation0]]
  $region22: #{tpu_custom_call.1} parent=0
    _
  %s6 = ssub.s32 1, %s4
  %s7 = scalar_select 0, %s6, %s4
  $region1: #{tpu_custom_call.1} parent=0
    #allocation2 [shape = 'u8[61440]{0}', space=vmem, size = 0xf000, scoped, tag = 'output window, operand 0, single buffered']
    #allocation3 [shape = 's32[1]{0}', space=sflag, size = 0x4, scoped, tag = 'scoped memory for tpu_custom_call.1']
    %8 = vsyncpa [#allocation3], 0
    // Predicated region
    $region2: #{tpu_custom_call.1} parent=1 // pred_check
      _
    $region3: #{tpu_custom_call.1} parent=1 // pred_check_branch
      %10 = sbr.rel (0) target = $region5
    $region4: #{tpu_custom_call.1} parent=1 // pred_region
      _
    $region5: #{tpu_custom_call.1} parent=1 // pred_fallthru
      _
    // Predicated region
    $region6: #{tpu_custom_call.1} parent=1 // pred_check
      _
    $region7: #{tpu_custom_call.1} parent=1 // pred_check_branch
      %12 = sbr.rel (0) target = $region9
    $region8: #{tpu_custom_call.1} parent=1 // pred_region
      _
    $region9: #{tpu_custom_call.1} parent=1 // pred_fallthru
      _
    // Predicated region
    $region10: #{tpu_custom_call.1} parent=1 // pred_check
      _
    $region11: #{tpu_custom_call.1} parent=1 // pred_check_branch
      %14 = sbr.rel (0) target = $region13
    $region12: #{tpu_custom_call.1} parent=1 // pred_region
      _
    $region13: #{tpu_custom_call.1} parent=1 // pred_fallthru
      _
    %v15 = vld [vmem:[%s0] sm:$0xff]
    %v16 = vld [vmem:[%s0 + $0x8] sm:$0xff]
    %v17 = vld [vmem:[%s0 + $0x10] sm:$0xff]
    %v18 = vld [vmem:[%s0 + $0x18] sm:$0xff]
    %v19 = vld [vmem:[%s0 + $0x20] sm:$0xff]
    %v20 = vld [vmem:[%s0 + $0x28] sm:$0xff]
    %v21 = vld [vmem:[%s0 + $0x30] sm:$0xff]
    %v22 = vld [vmem:[%s0 + $0x38] sm:$0xff]
    %v23 = vld [vmem:[%s0 + $0x40] sm:$0xff]
    %v24 = vld [vmem:[%s0 + $0x48] sm:$0xff]
    %v25 = vld [vmem:[%s0 + $0x50] sm:$0xff]
    %v26 = vld [vmem:[%s0 + $0x58] sm:$0xff]
    %v27 = vld [vmem:[%s0 + $0x60] sm:$0xff]
    %v28 = vld [vmem:[%s0 + $0x68] sm:$0xff]
    %v29 = vld [vmem:[%s0 + $0x70] sm:$0xff]
    %v30 = vld [vmem:[%s1] sm:$0xff]
    %v31 = vld [vmem:[%s1 + $0x8] sm:$0xff]
    %v32 = vld [vmem:[%s1 + $0x10] sm:$0xff]
    %v33 = vld [vmem:[%s1 + $0x18] sm:$0xff]
    %v34 = vld [vmem:[%s1 + $0x20] sm:$0xff]
    %v35 = vld [vmem:[%s1 + $0x28] sm:$0xff]
    %v36 = vld [vmem:[%s1 + $0x30] sm:$0xff]
    %v37 = vld [vmem:[%s1 + $0x38] sm:$0xff]
    %v38 = vld [vmem:[%s1 + $0x40] sm:$0xff]
    %v39 = vld [vmem:[%s1 + $0x48] sm:$0xff]
    %v40 = vld [vmem:[%s1 + $0x50] sm:$0xff]
    %v41 = vld [vmem:[%s1 + $0x58] sm:$0xff]
    %v42 = vld [vmem:[%s2] sm:$0x1]
    %v44 = vperm.slane %v42, 0
    %vm46 = vcmask 785408
    %v48 = vsel %vm46, %v15, 0
    %v51 = vsel %vm46, %v16, 0
    %v54 = vsel %vm46, %v17, 0
    %v57 = vsel %vm46, %v18, 0
    %v60 = vsel %vm46, %v19, 0
    %v63 = vsel %vm46, %v20, 0
    %v66 = vsel %vm46, %v21, 0
    %v69 = vsel %vm46, %v22, 0
    %v72 = vsel %vm46, %v23, 0
    %v75 = vsel %vm46, %v24, 0
    %v78 = vsel %vm46, %v25, 0
    %v81 = vsel %vm46, %v26, 0
    %v84 = vsel %vm46, %v27, 0
    %v87 = vsel %vm46, %v28, 0
    %v90 = vsel %vm46, %v29, 0
    %92 = vmatpush.msra.mxu0 0.0
    %93 = vmatpush.msra.mxu0 0.0
    %94 = vmatpush.msra.mxu0 0.0
    %95 = vmatpush.msra.mxu0 0.0
    %96 = vmatpush.msra.mxu0 %v41
    %97 = vmatpush.msra.mxu0 %v40
    %98 = vmatpush.msra.mxu0 %v39
    %99 = vmatpush.msra.mxu0 %v38
    %100 = vmatpush.msra.mxu0 %v37
    %101 = vmatpush.msra.mxu0 %v36
    %102 = vmatpush.msra.mxu0 %v35
    %103 = vmatpush.msra.mxu0 %v34
    %104 = vmatpush.msra.mxu0 %v33
    %105 = vmatpush.msra.mxu0 %v32
    %106 = vmatpush.msra.mxu0 %v31
    %107 = vmatpush.msra.mxu0 %v30
    %108 = vmatmul.f32.gmra.mxu0 %v48
    %v109 = vpop.f32.mrf.mxu0
    %v110 = vadd.f32 %v44, %v109
    %111 = vmatmul.f32.gmra.mxu0 %v51
    %v112 = vpop.f32.mrf.mxu0
    %v113 = vadd.f32 %v44, %v112
    %114 = vmatmul.f32.gmra.mxu0 %v54
    %v115 = vpop.f32.mrf.mxu0
    %v116 = vadd.f32 %v44, %v115
    %117 = vmatmul.f32.gmra.mxu0 %v57
    %v118 = vpop.f32.mrf.mxu0
    %v119 = vadd.f32 %v44, %v118
    %120 = vmatmul.f32.gmra.mxu0 %v60
    %v121 = vpop.f32.mrf.mxu0
    %v122 = vadd.f32 %v44, %v121
    %123 = vmatmul.f32.gmra.mxu0 %v63
    %v124 = vpop.f32.mrf.mxu0
    %v125 = vadd.f32 %v44, %v124
    %126 = vmatmul.f32.gmra.mxu0 %v66
    %v127 = vpop.f32.mrf.mxu0
    %v128 = vadd.f32 %v44, %v127
    %129 = vmatmul.f32.gmra.mxu0 %v69
    %v130 = vpop.f32.mrf.mxu0
    %v131 = vadd.f32 %v44, %v130
    %132 = vmatmul.f32.gmra.mxu0 %v72
    %v133 = vpop.f32.mrf.mxu0
    %v134 = vadd.f32 %v44, %v133
    %135 = vmatmul.f32.gmra.mxu0 %v75
    %v136 = vpop.f32.mrf.mxu0
    %v137 = vadd.f32 %v44, %v136
    %138 = vmatmul.f32.gmra.mxu0 %v78
    %v139 = vpop.f32.mrf.mxu0
    %v140 = vadd.f32 %v44, %v139
    %141 = vmatmul.f32.gmra.mxu0 %v81
    %v142 = vpop.f32.mrf.mxu0
    %v143 = vadd.f32 %v44, %v142
    %144 = vmatmul.f32.gmra.mxu0 %v84
    %v145 = vpop.f32.mrf.mxu0
    %v146 = vadd.f32 %v44, %v145
    %147 = vmatmul.f32.gmra.mxu0 %v87
    %v148 = vpop.f32.mrf.mxu0
    %v149 = vadd.f32 %v44, %v148
    %150 = vmatmul.f32.gmra.mxu0 %v90
    %v151 = vpop.f32.mrf.mxu0
    %v152 = vadd.f32 %v44, %v151
    %153 = vdwg.mxu0
    %154 = vst [vmem:[#allocation2] sm:$0xff] %v110
    %155 = vst [vmem:[#allocation2 + $0x8] sm:$0xff] %v113
    %156 = vst [vmem:[#allocation2 + $0x10] sm:$0xff] %v116
    %157 = vst [vmem:[#allocation2 + $0x18] sm:$0xff] %v119
    %158 = vst [vmem:[#allocation2 + $0x20] sm:$0xff] %v122
    %159 = vst [vmem:[#allocation2 + $0x28] sm:$0xff] %v125
    %160 = vst [vmem:[#allocation2 + $0x30] sm:$0xff] %v128
    %161 = vst [vmem:[#allocation2 + $0x38] sm:$0xff] %v131
    %162 = vst [vmem:[#allocation2 + $0x40] sm:$0xff] %v134
    %163 = vst [vmem:[#allocation2 + $0x48] sm:$0xff] %v137
    %164 = vst [vmem:[#allocation2 + $0x50] sm:$0xff] %v140
    %165 = vst [vmem:[#allocation2 + $0x58] sm:$0xff] %v143
    %166 = vst [vmem:[#allocation2 + $0x60] sm:$0xff] %v146
    %167 = vst [vmem:[#allocation2 + $0x68] sm:$0xff] %v149
    %168 = vst [vmem:[#allocation2 + $0x70] sm:$0xff] %v152
    // Predicated region
    $region14: #{tpu_custom_call.1} parent=1 // pred_check
      _
    $region15: #{tpu_custom_call.1} parent=1 // pred_check_branch
      %170 = sbr.rel (0) target = $region17
    $region16: #{tpu_custom_call.1} parent=1 // pred_region
      %172 = vsyncadd [#allocation3], 0
      %s173 = sshll.u32 [#allocation2], 4
      %s174 = int_to_ptr.vmem [resolvable:$true] %s173
      %s175 = sshll.u32 %s3, 4
      %s176 = int_to_ptr.hbm [resolvable:$true] %s175
      %181 = dma.vmem_to_hbm [thread:$0]  %s174, 1920, %s176, [#allocation3], 128, 128, 8
    $region17: #{tpu_custom_call.1} parent=1 // pred_fallthru
      _
    // Predicated region
    $region18: #{tpu_custom_call.1} parent=1 // pred_check
      _
    $region19: #{tpu_custom_call.1} parent=1 // pred_check_branch
      %183 = sbr.rel (0) target = $region21
    $region20: #{tpu_custom_call.1} parent=1 // pred_region
      %185 = dma.done [#allocation3], 1920
    $region21: #{tpu_custom_call.1} parent=1 // pred_fallthru
      _
    %186 = vsyncpa [#allocation3], 1

</llo_original>
